<compile_context>
chip_gen: v6e
topology: v6e:2x2x1
jax: 0.10.0
libtpu: 0.0.40
codegen_flags: <defaults>
</compile_context>

<pallas_src>
import math
from functools import partial

import jax
import jax.numpy as jnp
from jax.experimental import pallas as pl
from jax.experimental.pallas import tpu as pltpu


_BN_EPS = 1e-5
_LAYER_SPECS = ((64, 3, 1), (128, 4, 2), (256, 6, 2), (512, 3, 2))


def _round_up(x, m):
    return (x + m - 1) // m * m


# ----------------------------------------------------------------------------
# Pallas kernels
# ----------------------------------------------------------------------------
def _make_mm_kernel(act, fuse_add):
    """Single-K-block matmul: act((A @ B) * scale + bias [+ identity])."""
    def kernel(a_ref, b_ref, s_ref, c_ref, *rest):
        if fuse_add:
            id_ref, o_ref = rest
        else:
            (o_ref,) = rest
        acc = jnp.dot(a_ref[...].astype(jnp.bfloat16), b_ref[...],
                      preferred_element_type=jnp.float32)
        y = acc * s_ref[...] + c_ref[...]
        if fuse_add:
            y = y + id_ref[...]
        if act == "relu":
            y = jnp.maximum(y, 0.0)
        elif act == "sigmoid":
            y = jax.nn.sigmoid(y)
        o_ref[...] = y.astype(o_ref.dtype)
    return kernel


@partial(jax.jit, static_argnames=("act",))
def matmul_fused(a, b, scale, bias, identity=None, *, act="none"):
    """act((a @ b) * scale + bias [+ identity]).

    a: (M, K) f32 activations; b: (K, N) bf16 pre-folded weights;
    scale/bias: (1, N) f32 (BatchNorm folded in eval mode).
    K is kept as one full-extent block, so there is no reduction grid axis and
    no accumulator scratch; the result is written directly to the output tile.
    """
    M, K = a.shape
    K2, Nc = b.shape
    assert K == K2
    # Output-channel (lane) tile.
    if Nc % 256 == 0:
        tn = 256
    elif Nc % 128 == 0:
        tn = 128
    else:
        tn = Nc                      # full extent (e.g. 64 or code_size)
    # Row tile: keep >= 2 grid blocks when shapes allow so both v7x
    # TensorCores (and v5e/v6e pipelining) have work.
    if M > 256:
        tm = 256
        for t in (256, 128, 64, 32, 16, 8):
            if M % t == 0:
                tm = t
                break
    elif Nc == tn and M >= 32 and M % 16 == 0:
        tm = M // 2
    else:
        tm = M
    Mp = _round_up(M, tm)
    a_p = a if Mp == M else jnp.pad(a, ((0, Mp - M), (0, 0)))
    fuse_add = identity is not None

    inputs = [a_p, b, scale, bias]
    in_specs = [
        pl.BlockSpec((tm, K), lambda i, j: (i, 0)),
        pl.BlockSpec((K, tn), lambda i, j: (0, j)),
        pl.BlockSpec((1, tn), lambda i, j: (0, j)),
        pl.BlockSpec((1, tn), lambda i, j: (0, j)),
    ]
    if fuse_add:
        idp = identity if Mp == M else jnp.pad(identity, ((0, Mp - M), (0, 0)))
        inputs.append(idp)
        in_specs.append(pl.BlockSpec((tm, tn), lambda i, j: (i, j)))

    out = pl.pallas_call(
        _make_mm_kernel(act, fuse_add),
        out_shape=jax.ShapeDtypeStruct((Mp, Nc), jnp.float32),
        grid=(Mp // tm, Nc // tn),
        in_specs=in_specs,
        out_specs=pl.BlockSpec((tm, tn), lambda i, j: (i, j)),
        compiler_params=pltpu.CompilerParams(
            dimension_semantics=("parallel", "parallel")),
    )(*inputs)
    return out if Mp == M else out[:M]


def _conv3x3_kernel(xg_ref, w_ref, s_ref, b_ref, o_ref, *, Wp):
    """Direct 3x3 / stride-1 conv over a flattened, ring-padded spatial axis.

    out[p, :] = relu(scale * sum_{di,dj} xg[p + di*Wp + dj, :] @ w[3*di+dj] + bias)
    Only interior rows of the padded image are valid; the garbage ring is
    sliced off outside the kernel.  Channels stay on the lane axis throughout.
    """
    Lp, Cout = o_ref.shape[1], o_ref.shape[2]
    acc = jnp.zeros((Lp, Cout), jnp.float32)
    for di in range(3):
        for dj in range(3):
            a = xg_ref[0, pl.ds(di * Wp + dj, Lp), :].astype(jnp.bfloat16)
            acc = acc + jnp.dot(a, w_ref[di * 3 + dj],
                                preferred_element_type=jnp.float32)
    y = acc * s_ref[...] + b_ref[...]
    o_ref[0] = jnp.maximum(y, 0.0)


@jax.jit
def conv3x3_direct(x, wt, scale, bias):
    """3x3 / stride 1 / pad 1 conv + folded BN + ReLU.

    x: (N, H, W, Cin) f32 NHWC; wt: (9, Cin, Cout) bf16.
    Reads the activation once (no 9x im2col expansion in HBM).
    """
    N, H, W, Cin = x.shape
    Cout = wt.shape[2]
    Hp, Wp = H + 2, W + 2
    Lp = Hp * Wp
    ring = Wp + 1                      # extra zero rows: every tap window is in-bounds
    Lg = Lp + 2 * ring
    xp = jnp.pad(x, ((0, 0), (1, 1), (1, 1), (0, 0))).reshape(N, Lp, Cin)
    xg = jnp.pad(xp, ((0, 0), (ring, ring), (0, 0)))
    out = pl.pallas_call(
        partial(_conv3x3_kernel, Wp=Wp),
        out_shape=jax.ShapeDtypeStruct((N, Lp, Cout), jnp.float32),
        grid=(N,),
        in_specs=[
            pl.BlockSpec((1, Lg, Cin), lambda n: (n, 0, 0)),
            pl.BlockSpec((9, Cin, Cout), lambda n: (0, 0, 0)),
            pl.BlockSpec((1, Cout), lambda n: (0, 0)),
            pl.BlockSpec((1, Cout), lambda n: (0, 0)),
        ],
        out_specs=pl.BlockSpec((1, Lp, Cout), lambda n: (n, 0, 0)),
        compiler_params=pltpu.CompilerParams(
            dimension_semantics=("parallel",)),
    )(xg, wt, scale, bias)
    return out.reshape(N, Hp, Wp, Cout)[:, 1:1 + H, 1:1 + W, :]


def _sa_kernel(xp_ref, w_ref, o_ref):
    # xp_ref: (1, C, H+2, W+2) VMEM -- zero-padded input, one batch element
    # w_ref : (2, 9) SMEM          -- SpatialAttention conv1 weight [avg, max]
    # o_ref : (1, C, H, W)         -- sigmoid(conv3x3([mean_c, max_c])) * x
    # (kept in its proven per-batch spatial form: absolute cost is negligible)
    _, C, H, W = o_ref.shape
    xp = xp_ref[0]                       # (C, H+2, W+2)
    avg = jnp.mean(xp, axis=0)           # (H+2, W+2) -- zero-pad preserved
    mx = jnp.max(xp, axis=0)             # (H+2, W+2)
    acc = jnp.zeros((H, W), jnp.float32)
    for di in range(3):
        for dj in range(3):
            k = di * 3 + dj
            acc = acc + w_ref[0, k] * avg[di:di + H, dj:dj + W]
            acc = acc + w_ref[1, k] * mx[di:di + H, dj:dj + W]
    att = jax.nn.sigmoid(acc)            # (H, W)
    xc = xp[:, 1:1 + H, 1:1 + W]         # (C, H, W) == original x
    o_ref[0] = (xc * att[None, :, :]).astype(o_ref.dtype)


@jax.jit
def spatial_attention_apply(x, w_sa):
    """x: (N, C, H, W) NCHW; w_sa: (2, 9). Returns sigmoid(conv([avg,max])) * x."""
    N, C, H, W = x.shape
    xp = jnp.pad(x, ((0, 0), (0, 0), (1, 1), (1, 1)))
    return pl.pallas_call(
        _sa_kernel,
        out_shape=jax.ShapeDtypeStruct((N, C, H, W), jnp.float32),
        grid=(N,),
        in_specs=[
            pl.BlockSpec((1, C, H + 2, W + 2), lambda n: (n, 0, 0, 0)),
            pl.BlockSpec(memory_space=pltpu.MemorySpace.SMEM),
        ],
        out_specs=pl.BlockSpec((1, C, H, W), lambda n: (n, 0, 0, 0)),
        compiler_params=pltpu.CompilerParams(
            dimension_semantics=("parallel",)),
    )(xp, w_sa)


# ----------------------------------------------------------------------------
# JAX glue: NHWC im2col (7x7 stem + stride-2 3x3 only), pooling, ResNet plumbing
# ----------------------------------------------------------------------------
def im2col_nhwc(x, k, stride, pad):
    """NHWC -> (N*Ho*Wo, k*k*C); patch columns ordered (kh, kw, C) -- no
    transposes of the activation (C stays innermost / lane-contiguous)."""
    N, H, W, C = x.shape
    xp = jnp.pad(x, ((0, 0), (pad, pad), (pad, pad), (0, 0)))
    Ho = (H + 2 * pad - k) // stride + 1
    Wo = (W + 2 * pad - k) // stride + 1
    cols = []
    for i in range(k):
        for j in range(k):
            cols.append(xp[:, i:i + stride * (Ho - 1) + 1:stride,
                              j:j + stride * (Wo - 1) + 1:stride, :])
    patches = jnp.concatenate(cols, axis=-1)          # (N, Ho, Wo, k*k*C)
    return patches.reshape(N * Ho * Wo, k * k * C), Ho, Wo


def conv_mm(x, cp, *, kh, stride, pad, act, identity=None):
    """Conv (as matmul) + folded BN + activation (+ fused residual)."""
    N, H, W, Cin = x.shape
    Cout = cp["wm"].shape[1]
    if kh == 1:
        xs = x if stride == 1 else x[:, ::stride, ::stride, :]
        Ho, Wo = xs.shape[1], xs.shape[2]
        a = xs.reshape(N * Ho * Wo, Cin)
    else:
        # TODO(synk): stride-2 convs (7x7 stem, three 3x3) use XLA im2col glue.
        a, Ho, Wo = im2col_nhwc(x, kh, stride, pad)
    idm = None if identity is None else identity.reshape(N * Ho * Wo, Cout)
    y = matmul_fused(a, cp["wm"], cp["scale"], cp["bias"], idm, act=act)
    return y.reshape(N, Ho, Wo, Cout)


def maxpool_3x3_s2(x):
    # TODO(synk): max-pool left as lax.reduce_window glue (not a Pallas kernel).
    return jax.lax.reduce_window(
        x, -jnp.inf, jax.lax.max,
        window_dimensions=(1, 3, 3, 1), window_strides=(1, 2, 2, 1),
        padding=((0, 0), (1, 1), (1, 1), (0, 0)))


def bottleneck(x, blk, stride):
    identity = x
    out = conv_mm(x, blk["conv1"], kh=1, stride=1, pad=0, act="relu")
    c2 = blk["conv2"]
    if "wt" in c2:       # 3x3 stride-1: direct Pallas conv, BN+ReLU fused
        out = conv3x3_direct(out, c2["wt"], c2["scale"], c2["bias"])
    else:                # 3x3 stride-2: im2col -> fused Pallas matmul
        out = conv_mm(out, c2, kh=3, stride=stride, pad=1, act="relu")
    if "down" in blk:
        identity = conv_mm(x, blk["down"], kh=1, stride=stride, pad=0, act="none")
    # conv3 + BN + residual add + ReLU, all fused in one matmul epilogue.
    return conv_mm(out, blk["conv3"], kh=1, stride=1, pad=0, act="relu",
                   identity=identity)


def ash_forward(x, p):
    """x: (N, 3, H, W) NCHW, as in the PyTorch module."""
    x = spatial_attention_apply(x, p["sa_w"])           # x = self.sa(x) * x
    x = jnp.transpose(x, (0, 2, 3, 1))                  # single NCHW->NHWC
    x = conv_mm(x, p["conv1"], kh=7, stride=2, pad=3, act="relu")
    x = maxpool_3x3_s2(x)
    for li, layer in enumerate(p["layers"]):
        lstride = 1 if li == 0 else 2
        for bi, blk in enumerate(layer):
            x = bottleneck(x, blk, lstride if bi == 0 else 1)
    feat = jnp.mean(x, axis=(1, 2))                     # adaptive avgpool (1,1)
    fc = p["fc"]
    # fc = Sequential(Linear(2048, code_size), Sigmoid), fused in the epilogue.
    return matmul_fused(feat, fc["wm"], fc["scale"], fc["bias"], act="sigmoid")


# ----------------------------------------------------------------------------
# Deterministic synthetic parameters (ASH / torchvision ResNet-50 shapes)
# ----------------------------------------------------------------------------
class _KeyGen:
    def __init__(self, seed):
        self._key = jax.random.PRNGKey(seed)
        self._i = 0

    def __call__(self):
        self._i += 1
        return jax.random.fold_in(self._key, self._i)


def _he(key, shape, fan_in):
    return jax.random.normal(key, shape, jnp.float32) * math.sqrt(2.0 / fan_in)


def _conv_bn_raw(kg, cin, cout, k):
    return {"w": _he(kg(), (cout, cin, k, k), cin * k * k),
            "gamma": jnp.ones((cout,), jnp.float32),
            "beta": jnp.zeros((cout,), jnp.float32),
            "mean": jnp.zeros((cout,), jnp.float32),   # BN running stats
            "var": jnp.ones((cout,), jnp.float32)}


def make_raw_params(seed, code_size):
    kg = _KeyGen(seed)
    params = {"sa_w": _he(kg(), (1, 2, 3, 3), 2 * 3 * 3),
              "conv1": _conv_bn_raw(kg, 3, 64, 7)}
    layers = []
    inplanes = 64
    for planes, n_blocks, stride in _LAYER_SPECS:
        layer = []
        for bi in range(n_blocks):
            s = stride if bi == 0 else 1
            blk = {"conv1": _conv_bn_raw(kg, inplanes, planes, 1),
                   "conv2": _conv_bn_raw(kg, planes, planes, 3),
                   "conv3": _conv_bn_raw(kg, planes, planes * 4, 1)}
            if s != 1 or inplanes != planes * 4:
                blk["down"] = _conv_bn_raw(kg, inplanes, planes * 4, 1)
            layer.append(blk)
            inplanes = planes * 4
        layers.append(layer)
    params["layers"] = layers
    params["fc_w"] = _he(kg(), (code_size, 2048), 2048)
    params["fc_b"] = jax.random.normal(kg(), (code_size,), jnp.float32) * 0.01
    return params


def _fold_bn(p):
    # Eval-mode BN: scale = gamma / sqrt(running_var + eps),
    #               bias  = beta - running_mean * scale.
    scale = p["gamma"] / jnp.sqrt(p["var"] + _BN_EPS)
    bias = p["beta"] - p["mean"] * scale
    return (scale.reshape(1, -1).astype(jnp.float32),
            bias.reshape(1, -1).astype(jnp.float32))


def _prep_mm(p):
    w = p["w"]                                   # (Cout, Cin, kh, kw)
    cout, cin, kh, kw = w.shape
    wm = jnp.transpose(w, (2, 3, 1, 0)).reshape(kh * kw * cin, cout)
    s, b = _fold_bn(p)
    return {"wm": wm.astype(jnp.bfloat16), "scale": s, "bias": b}


def _prep_direct(p):
    w = p["w"]                                   # (Cout, Cin, 3, 3)
    cout, cin, _, _ = w.shape
    wt = jnp.transpose(w, (2, 3, 1, 0)).reshape(9, cin, cout)
    s, b = _fold_bn(p)
    return {"wt": wt.astype(jnp.bfloat16), "scale": s, "bias": b}


def prepare_params(raw):
    """One-time weight preparation: fold BN into per-channel scale/bias,
    rearrange weights into matmul / direct-conv form and cast them to bf16."""
    fp = {"sa_w": raw["sa_w"].reshape(2, 9).astype(jnp.float32),
          "conv1": _prep_mm(raw["conv1"])}
    layers = []
    for (planes, n_blocks, lstride), layer_raw in zip(_LAYER_SPECS,
                                                      raw["layers"]):
        blocks = []
        for bi, braw in enumerate(layer_raw):
            s = lstride if bi == 0 else 1
            blk = {"conv1": _prep_mm(braw["conv1"]),
                   "conv2": (_prep_direct(braw["conv2"]) if s == 1
                             else _prep_mm(braw["conv2"])),
                   "conv3": _prep_mm(braw["conv3"])}
            if "down" in braw:
                blk["down"] = _prep_mm(braw["down"])
            blocks.append(blk)
        layers.append(blocks)
    fp["layers"] = layers
    code = raw["fc_w"].shape[0]
    fp["fc"] = {"wm": jnp.transpose(raw["fc_w"]).astype(jnp.bfloat16),
                "scale": jnp.ones((1, code), jnp.float32),
                "bias": raw["fc_b"].reshape(1, code).astype(jnp.float32)}
    return fp


if __name__ == "__main__":
    code_size = 32
    raw = make_raw_params(seed=0, code_size=code_size)
    params = prepare_params(raw)
    # Small, ResNet-50-compatible input: NCHW, 3 channels, 32x32 spatial.
    x = jax.random.normal(jax.random.PRNGKey(0), (2, 3, 32, 32), jnp.float32)
    out = jax.block_until_ready(ash_forward(x, params))
    assert out.shape == (2, code_size), out.shape
    assert bool(jnp.all(jnp.isfinite(out)))
    assert bool(jnp.all((out >= 0.0) & (out <= 1.0)))
    print("KERNEL_OK")
</pallas_src>

<mosaic_0001>
module attributes {stable_mosaic.version = 11 : i64} {
  func.func @_sa_kernel(%arg0: i32, %arg1: memref<1x3x34x34xf32, #tpu.memory_space<vmem>>, %arg2: memref<2x9xf32, #tpu.memory_space<smem>>, %arg3: memref<1x3x32x32xf32, #tpu.memory_space<vmem>>) attributes {dimension_semantics = [#tpu.dimension_semantics<parallel>], iteration_bounds = array<i64: 2>, scalar_prefetch = 0 : i64, scratch_operands = 0 : i64, tpu.core_type = #tpu.core_type<tc>, window_params = [{transform_indices = @transform_0, window_bounds = array<i64: 1, 3, 34, 34>}, {transform_indices = @transform_1, window_bounds = array<i64: 2, 9>}, {transform_indices = @transform_2, window_bounds = array<i64: 1, 3, 32, 32>}]} {
    %c0 = arith.constant 0 : index
    %c0_0 = arith.constant 0 : index
    %c0_1 = arith.constant 0 : index
    %c0_2 = arith.constant 0 : index
    %0 = vector.load %arg1[%c0, %c0_0, %c0_1, %c0_2] : memref<1x3x34x34xf32, #tpu.memory_space<vmem>>, vector<1x3x34x34xf32>
    %1 = vector.shape_cast %0 : vector<1x3x34x34xf32> to vector<3x34x34xf32>
    %cst = arith.constant dense<0.000000e+00> : vector<34x34xf32>
    %2 = vector.multi_reduction <add>, %1, %cst [0] : vector<3x34x34xf32> to vector<34x34xf32>
    %cst_3 = arith.constant 3.000000e+00 : f32
    %3 = vector.broadcast %cst_3 : f32 to vector<34x34xf32>
    %4 = arith.divf %2, %3 : vector<34x34xf32>
    %cst_4 = arith.constant dense<0xFF800000> : vector<34x34xf32>
    %5 = vector.multi_reduction <maximumf>, %1, %cst_4 [0] : vector<3x34x34xf32> to vector<34x34xf32>
    %cst_5 = arith.constant 0.000000e+00 : f32
    %6 = vector.broadcast %cst_5 : f32 to vector<32x32xf32>
    %c0_6 = arith.constant 0 : index
    %c0_7 = arith.constant 0 : index
    %7 = memref.load %arg2[%c0_6, %c0_7] : memref<2x9xf32, #tpu.memory_space<smem>>
    %8 = vector.extract_strided_slice %4 {offsets = [0, 0], sizes = [32, 32], strides = [1, 1]} : vector<34x34xf32> to vector<32x32xf32>
    %9 = vector.broadcast %7 : f32 to vector<32x32xf32>
    %10 = arith.mulf %9, %8 : vector<32x32xf32>
    %11 = arith.addf %6, %10 : vector<32x32xf32>
    %c1 = arith.constant 1 : index
    %c0_8 = arith.constant 0 : index
    %12 = memref.load %arg2[%c1, %c0_8] : memref<2x9xf32, #tpu.memory_space<smem>>
    %13 = vector.extract_strided_slice %5 {offsets = [0, 0], sizes = [32, 32], strides = [1, 1]} : vector<34x34xf32> to vector<32x32xf32>
    %14 = vector.broadcast %12 : f32 to vector<32x32xf32>
    %15 = arith.mulf %14, %13 : vector<32x32xf32>
    %16 = arith.addf %11, %15 : vector<32x32xf32>
    %c0_9 = arith.constant 0 : index
    %c1_10 = arith.constant 1 : index
    %17 = memref.load %arg2[%c0_9, %c1_10] : memref<2x9xf32, #tpu.memory_space<smem>>
    %18 = vector.extract_strided_slice %4 {offsets = [0, 1], sizes = [32, 32], strides = [1, 1]} : vector<34x34xf32> to vector<32x32xf32>
    %19 = vector.broadcast %17 : f32 to vector<32x32xf32>
    %20 = arith.mulf %19, %18 : vector<32x32xf32>
    %21 = arith.addf %16, %20 : vector<32x32xf32>
    %c1_11 = arith.constant 1 : index
    %c1_12 = arith.constant 1 : index
    %22 = memref.load %arg2[%c1_11, %c1_12] : memref<2x9xf32, #tpu.memory_space<smem>>
    %23 = vector.extract_strided_slice %5 {offsets = [0, 1], sizes = [32, 32], strides = [1, 1]} : vector<34x34xf32> to vector<32x32xf32>
    %24 = vector.broadcast %22 : f32 to vector<32x32xf32>
    %25 = arith.mulf %24, %23 : vector<32x32xf32>
    %26 = arith.addf %21, %25 : vector<32x32xf32>
    %c0_13 = arith.constant 0 : index
    %c2 = arith.constant 2 : index
    %27 = memref.load %arg2[%c0_13, %c2] : memref<2x9xf32, #tpu.memory_space<smem>>
    %28 = vector.extract_strided_slice %4 {offsets = [0, 2], sizes = [32, 32], strides = [1, 1]} : vector<34x34xf32> to vector<32x32xf32>
    %29 = vector.broadcast %27 : f32 to vector<32x32xf32>
    %30 = arith.mulf %29, %28 : vector<32x32xf32>
    %31 = arith.addf %26, %30 : vector<32x32xf32>
    %c1_14 = arith.constant 1 : index
    %c2_15 = arith.constant 2 : index
    %32 = memref.load %arg2[%c1_14, %c2_15] : memref<2x9xf32, #tpu.memory_space<smem>>
    %33 = vector.extract_strided_slice %5 {offsets = [0, 2], sizes = [32, 32], strides = [1, 1]} : vector<34x34xf32> to vector<32x32xf32>
    %34 = vector.broadcast %32 : f32 to vector<32x32xf32>
    %35 = arith.mulf %34, %33 : vector<32x32xf32>
    %36 = arith.addf %31, %35 : vector<32x32xf32>
    %c0_16 = arith.constant 0 : index
    %c3 = arith.constant 3 : index
    %37 = memref.load %arg2[%c0_16, %c3] : memref<2x9xf32, #tpu.memory_space<smem>>
    %38 = vector.extract_strided_slice %4 {offsets = [1, 0], sizes = [32, 32], strides = [1, 1]} : vector<34x34xf32> to vector<32x32xf32>
    %39 = vector.broadcast %37 : f32 to vector<32x32xf32>
    %40 = arith.mulf %39, %38 : vector<32x32xf32>
    %41 = arith.addf %36, %40 : vector<32x32xf32>
    %c1_17 = arith.constant 1 : index
    %c3_18 = arith.constant 3 : index
    %42 = memref.load %arg2[%c1_17, %c3_18] : memref<2x9xf32, #tpu.memory_space<smem>>
    %43 = vector.extract_strided_slice %5 {offsets = [1, 0], sizes = [32, 32], strides = [1, 1]} : vector<34x34xf32> to vector<32x32xf32>
    %44 = vector.broadcast %42 : f32 to vector<32x32xf32>
    %45 = arith.mulf %44, %43 : vector<32x32xf32>
    %46 = arith.addf %41, %45 : vector<32x32xf32>
    %c0_19 = arith.constant 0 : index
    %c4 = arith.constant 4 : index
    %47 = memref.load %arg2[%c0_19, %c4] : memref<2x9xf32, #tpu.memory_space<smem>>
    %48 = vector.extract_strided_slice %4 {offsets = [1, 1], sizes = [32, 32], strides = [1, 1]} : vector<34x34xf32> to vector<32x32xf32>
    %49 = vector.broadcast %47 : f32 to vector<32x32xf32>
    %50 = arith.mulf %49, %48 : vector<32x32xf32>
    %51 = arith.addf %46, %50 : vector<32x32xf32>
    %c1_20 = arith.constant 1 : index
    %c4_21 = arith.constant 4 : index
    %52 = memref.load %arg2[%c1_20, %c4_21] : memref<2x9xf32, #tpu.memory_space<smem>>
    %53 = vector.extract_strided_slice %5 {offsets = [1, 1], sizes = [32, 32], strides = [1, 1]} : vector<34x34xf32> to vector<32x32xf32>
    %54 = vector.broadcast %52 : f32 to vector<32x32xf32>
    %55 = arith.mulf %54, %53 : vector<32x32xf32>
    %56 = arith.addf %51, %55 : vector<32x32xf32>
    %c0_22 = arith.constant 0 : index
    %c5 = arith.constant 5 : index
    %57 = memref.load %arg2[%c0_22, %c5] : memref<2x9xf32, #tpu.memory_space<smem>>
    %58 = vector.extract_strided_slice %4 {offsets = [1, 2], sizes = [32, 32], strides = [1, 1]} : vector<34x34xf32> to vector<32x32xf32>
    %59 = vector.broadcast %57 : f32 to vector<32x32xf32>
    %60 = arith.mulf %59, %58 : vector<32x32xf32>
    %61 = arith.addf %56, %60 : vector<32x32xf32>
    %c1_23 = arith.constant 1 : index
    %c5_24 = arith.constant 5 : index
    %62 = memref.load %arg2[%c1_23, %c5_24] : memref<2x9xf32, #tpu.memory_space<smem>>
    %63 = vector.extract_strided_slice %5 {offsets = [1, 2], sizes = [32, 32], strides = [1, 1]} : vector<34x34xf32> to vector<32x32xf32>
    %64 = vector.broadcast %62 : f32 to vector<32x32xf32>
    %65 = arith.mulf %64, %63 : vector<32x32xf32>
    %66 = arith.addf %61, %65 : vector<32x32xf32>
    %c0_25 = arith.constant 0 : index
    %c6 = arith.constant 6 : index
    %67 = memref.load %arg2[%c0_25, %c6] : memref<2x9xf32, #tpu.memory_space<smem>>
    %68 = vector.extract_strided_slice %4 {offsets = [2, 0], sizes = [32, 32], strides = [1, 1]} : vector<34x34xf32> to vector<32x32xf32>
    %69 = vector.broadcast %67 : f32 to vector<32x32xf32>
    %70 = arith.mulf %69, %68 : vector<32x32xf32>
    %71 = arith.addf %66, %70 : vector<32x32xf32>
    %c1_26 = arith.constant 1 : index
    %c6_27 = arith.constant 6 : index
    %72 = memref.load %arg2[%c1_26, %c6_27] : memref<2x9xf32, #tpu.memory_space<smem>>
    %73 = vector.extract_strided_slice %5 {offsets = [2, 0], sizes = [32, 32], strides = [1, 1]} : vector<34x34xf32> to vector<32x32xf32>
    %74 = vector.broadcast %72 : f32 to vector<32x32xf32>
    %75 = arith.mulf %74, %73 : vector<32x32xf32>
    %76 = arith.addf %71, %75 : vector<32x32xf32>
    %c0_28 = arith.constant 0 : index
    %c7 = arith.constant 7 : index
    %77 = memref.load %arg2[%c0_28, %c7] : memref<2x9xf32, #tpu.memory_space<smem>>
    %78 = vector.extract_strided_slice %4 {offsets = [2, 1], sizes = [32, 32], strides = [1, 1]} : vector<34x34xf32> to vector<32x32xf32>
    %79 = vector.broadcast %77 : f32 to vector<32x32xf32>
    %80 = arith.mulf %79, %78 : vector<32x32xf32>
    %81 = arith.addf %76, %80 : vector<32x32xf32>
    %c1_29 = arith.constant 1 : index
    %c7_30 = arith.constant 7 : index
    %82 = memref.load %arg2[%c1_29, %c7_30] : memref<2x9xf32, #tpu.memory_space<smem>>
    %83 = vector.extract_strided_slice %5 {offsets = [2, 1], sizes = [32, 32], strides = [1, 1]} : vector<34x34xf32> to vector<32x32xf32>
    %84 = vector.broadcast %82 : f32 to vector<32x32xf32>
    %85 = arith.mulf %84, %83 : vector<32x32xf32>
    %86 = arith.addf %81, %85 : vector<32x32xf32>
    %c0_31 = arith.constant 0 : index
    %c8 = arith.constant 8 : index
    %87 = memref.load %arg2[%c0_31, %c8] : memref<2x9xf32, #tpu.memory_space<smem>>
    %88 = vector.extract_strided_slice %4 {offsets = [2, 2], sizes = [32, 32], strides = [1, 1]} : vector<34x34xf32> to vector<32x32xf32>
    %89 = vector.broadcast %87 : f32 to vector<32x32xf32>
    %90 = arith.mulf %89, %88 : vector<32x32xf32>
    %91 = arith.addf %86, %90 : vector<32x32xf32>
    %c1_32 = arith.constant 1 : index
    %c8_33 = arith.constant 8 : index
    %92 = memref.load %arg2[%c1_32, %c8_33] : memref<2x9xf32, #tpu.memory_space<smem>>
    %93 = vector.extract_strided_slice %5 {offsets = [2, 2], sizes = [32, 32], strides = [1, 1]} : vector<34x34xf32> to vector<32x32xf32>
    %94 = vector.broadcast %92 : f32 to vector<32x32xf32>
    %95 = arith.mulf %94, %93 : vector<32x32xf32>
    %96 = arith.addf %91, %95 : vector<32x32xf32>
    %97 = arith.negf %96 : vector<32x32xf32>
    %98 = math.exp %97 : vector<32x32xf32>
    %cst_34 = arith.constant 1.000000e+00 : f32
    %99 = vector.broadcast %cst_34 : f32 to vector<32x32xf32>
    %100 = arith.addf %99, %98 : vector<32x32xf32>
    %101 = arith.divf %99, %100 : vector<32x32xf32>
    %102 = vector.extract_strided_slice %1 {offsets = [0, 1, 1], sizes = [3, 32, 32], strides = [1, 1, 1]} : vector<3x34x34xf32> to vector<3x32x32xf32>
    %103 = vector.shape_cast %101 : vector<32x32xf32> to vector<1x32x32xf32>
    %104 = vector.broadcast %103 : vector<1x32x32xf32> to vector<3x32x32xf32>
    %105 = arith.mulf %102, %104 : vector<3x32x32xf32>
    %c0_35 = arith.constant 0 : index
    %c0_36 = arith.constant 0 : index
    %c0_37 = arith.constant 0 : index
    %c0_38 = arith.constant 0 : index
    %106 = vector.load %arg3[%c0_35, %c0_36, %c0_37, %c0_38] : memref<1x3x32x32xf32, #tpu.memory_space<vmem>>, vector<1x3x32x32xf32>
    %107 = vector.shape_cast %106 : vector<1x3x32x32xf32> to vector<3x32x32xf32>
    %108 = vector.shape_cast %105 : vector<3x32x32xf32> to vector<1x3x32x32xf32>
    tpu.vector_store %arg3[%c0_35, %c0_36, %c0_37, %c0_38], %108 {strides = array<i32>} : memref<1x3x32x32xf32, #tpu.memory_space<vmem>>, vector<1x3x32x32xf32>,
    return
  }
  func.func @transform_0(%arg0: i32) -> (i32, i32, i32, i32) {
    %c0_i32 = arith.constant 0 : i32
    %c0_i32_0 = arith.constant 0 : i32
    %c0_i32_1 = arith.constant 0 : i32
    %c0_i32_2 = arith.constant 0 : i32
    return %arg0, %c0_i32, %c0_i32_0, %c0_i32_1 : i32, i32, i32, i32
  }
  func.func @transform_1(%arg0: i32) -> (i32, i32) {
    %c0_i32 = arith.constant 0 : i32
    %c0_i32_0 = arith.constant 0 : i32
    %c0_i32_1 = arith.constant 0 : i32
    return %c0_i32, %c0_i32_0 : i32, i32
  }
  func.func @transform_2(%arg0: i32) -> (i32, i32, i32, i32) {
    %c0_i32 = arith.constant 0 : i32
    %c0_i32_0 = arith.constant 0 : i32
    %c0_i32_1 = arith.constant 0 : i32
    %c0_i32_2 = arith.constant 0 : i32
    return %arg0, %c0_i32, %c0_i32_0, %c0_i32_1 : i32, i32, i32, i32
  }
}

</mosaic_0001>

<llo_original>
// kernel: spatial_attention_apply.1
$region0: #{spatial_attention_apply.1}
  #allocation0 [shape = 'u32[]', space=smem, size = 0x4, offset = 0x4, fixed_abs, tag = 'smem constant byte address 0x4 - core index']
  #allocation1 [shape = 'u32[144,128]{1,0:T(1,128)}', space=vmem, size = 0x12000, scoped, tag = 'internal scratch']
  %s0 = inlined_call_operand.vmem [shape: f32[2,3,34,34], index: 0, kind: input, shape index: {}]
  %s1 = inlined_call_operand.vmem [shape: f32[2,9], index: 1, kind: input, shape index: {}]
  %s2 = inlined_call_operand.hbm [shape: f32[2,3,32,32], index: 2, kind: output, shape index: {}]
  %s3 = sld [smem:[#allocation0]]
  $region45: #{spatial_attention_apply.1} parent=0
    _
  %s5 = ssub.s32 1, %s3
  %s6 = scalar_select 0, %s5, %s3
  $region1: #{spatial_attention_apply.1} parent=0
    #allocation2 [shape = 'u8[1024]{0}', space=smem, size = 0x400, scoped, tag = 'input window, operand 1, single buffered']
    #allocation3 [shape = 's32[2]{0}', space=sflag, size = 0x8, scoped, tag = 'scoped memory for spatial_attention_apply.1']
    #allocation4 [shape = 's32[2]{0}', space=sflag, size = 0x8, scoped, tag = 'scoped memory for spatial_attention_apply.1']
    #allocation5 [shape = 'u8[98304]{0}', space=vmem, size = 0x18000, scoped, tag = 'output window, operand 0']
    %7 = vsyncpa [#allocation4], 0
    %8 = vsyncpa [#allocation3], 0
    %s9 = scalar_lea.sflag [#allocation3], 1
    %10 = vsyncpa %s9, 0
    loop: start=0, step=1, limit=4
    $region2: #{spatial_attention_apply.1} parent=1 // loop_pre_header
      _
    $region3: #{spatial_attention_apply.1} parent=1 // loop_header
      %s12 = sphi 0, %s16
      %p13 = scmp.ge.s32.totalorder %s12, 4
      %s22 = sphi 0, %s24
      %s25 = sphi 0, %s22
      %s26 = sphi 0, %s25
      %s42 = sphi 0, %s26
      %s46 = sphi 0, %s46
      %s48 = sphi 0, %s46
      %s49 = sphi 0, %s48
      %s63 = sphi 0, %s49
      %s69 = sphi 0, %s71
      %s72 = sphi 0, %s69
      %s73 = sphi 0, %s72
      %s89 = sphi 0, %s73
    $region4: #{spatial_attention_apply.1} parent=1 // loop_header_branch
      %15 = sbr.rel (%p13) target = $region8
    $region5: #{spatial_attention_apply.1} parent=1 // loop_body
      %s17 = ssub.s32 %s12, 1
      %s18 = ssub.s32 %s12, 2
      %s19 = sadd.s32 %s12, 1
      %s20 = ssub.s32 %s12, %s19
      %p21 = scmp.eq.s32.totalorder %s20, 0
      %s23 = sadd.s32 %s22, 1
      %s24 = scalar_select %p21, %s22, %s23
      %p27 = pneg %p21
      %p28 = scmp.eq.s32.totalorder %s12, 1
      %p29 = por %p27, %p28
      %p30 = scmp.ne.s32.totalorder %s22, %s25
      %p31 = scmp.eq.s32.totalorder %s12, 0
      %p32 = por %p30, %p31
      %p33 = scmp.ne.s32.totalorder %s22, %s25
      %p34 = scmp.eq.s32.totalorder %s17, 1
      %p35 = por %p33, %p34
      %p36 = scmp.ne.s32.totalorder %s25, %s26
      %p37 = scmp.eq.s32.totalorder %s17, 0
      %p38 = por %p36, %p37
      %p39 = scmp.ne.s32.totalorder %s25, %s26
      %p40 = scmp.eq.s32.totalorder %s18, 1
      %p41 = por %p39, %p40
      %p43 = scmp.ne.s32.totalorder %s26, %s42
      %p44 = scmp.eq.s32.totalorder %s18, 0
      %p45 = por %p43, %p44
      %s47 = sadd.s32 %s46, 1
      %p50 = scmp.eq.s32.totalorder %s12, 1
      %p51 = scmp.ne.s32.totalorder %s46, %s48
      %p52 = scmp.eq.s32.totalorder %s12, 0
      %p53 = por %p51, %p52
      %p54 = scmp.ne.s32.totalorder %s46, %s48
      %p55 = scmp.eq.s32.totalorder %s17, 1
      %p56 = por %p54, %p55
      %p57 = scmp.ne.s32.totalorder %s48, %s49
      %p58 = scmp.eq.s32.totalorder %s17, 0
      %p59 = por %p57, %p58
      %p60 = scmp.ne.s32.totalorder %s48, %s49
      %p61 = scmp.eq.s32.totalorder %s18, 1
      %p62 = por %p60, %p61
      %p64 = scmp.ne.s32.totalorder %s49, %s63
      %p65 = scmp.eq.s32.totalorder %s18, 0
      %p66 = por %p64, %p65
      %s67 = ssub.s32 %s12, %s19
      %p68 = scmp.eq.s32.totalorder %s67, 0
      %s70 = sadd.s32 %s69, 1
      %s71 = scalar_select %p68, %s69, %s70
      %p74 = pneg %p68
      %p75 = scmp.eq.s32.totalorder %s12, 1
      %p76 = por %p74, %p75
      %p77 = scmp.ne.s32.totalorder %s69, %s72
      %p78 = scmp.eq.s32.totalorder %s12, 0
      %p79 = por %p77, %p78
      %p80 = scmp.ne.s32.totalorder %s69, %s72
      %p81 = scmp.eq.s32.totalorder %s17, 1
      %p82 = por %p80, %p81
      %p83 = scmp.ne.s32.totalorder %s72, %s73
      %p84 = scmp.eq.s32.totalorder %s17, 0
      %p85 = por %p83, %p84
      %p86 = scmp.ne.s32.totalorder %s72, %s73
      %p87 = scmp.eq.s32.totalorder %s18, 1
      %p88 = por %p86, %p87
      %p90 = scmp.ne.s32.totalorder %s73, %s89
      %p91 = scmp.eq.s32.totalorder %s18, 0
      %p92 = por %p90, %p91
      %p93 = scmp.le.s32.totalorder 1, %s12
      %p94 = scmp.lt.s32.totalorder %s12, 3
      %p95 = pnand %p93, %p94
      %p96 = pneg %p95
      // Predicated region
      $region9: #{spatial_attention_apply.1} parent=5 // pred_check
        _
      $region10: #{spatial_attention_apply.1} parent=5 // pred_check_branch
        %98 = sbr.rel (%p95) target = $region12
      $region11: #{spatial_attention_apply.1} parent=5 // pred_region
        %s99 = ssub.s32 %s12, 1
        // Predicated region
        $region13: #{spatial_attention_apply.1} parent=11 // pred_check
          %p100 = pneg %p59
        $region14: #{spatial_attention_apply.1} parent=11 // pred_check_branch
          %102 = sbr.rel (%p100) target = $region16
        $region15: #{spatial_attention_apply.1} parent=11 // pred_region
          %s104 = ssub.s32 32, 32
          %105 = vsyncadd [#allocation4], %s104
          %s107 = sshll.u32 %s1, 4
          %s108 = int_to_ptr.vmem [resolvable:$true] %s107
          %110 = dma.vmem_to_smem %s108, 32, [#allocation2], [#allocation4]
        $region16: #{spatial_attention_apply.1} parent=11 // pred_fallthru
          _
      $region12: #{spatial_attention_apply.1} parent=5 // pred_fallthru
        _
      %p111 = scmp.lt.s32.totalorder %s12, 2
      // Predicated region
      $region17: #{spatial_attention_apply.1} parent=5 // pred_check
        %p112 = pneg %p111
      $region18: #{spatial_attention_apply.1} parent=5 // pred_check_branch
        %114 = sbr.rel (%p112) target = $region20
      $region19: #{spatial_attention_apply.1} parent=5 // pred_region
        // Predicated region
        $region21: #{spatial_attention_apply.1} parent=19 // pred_check
          %p115 = pneg %p32
        $region22: #{spatial_attention_apply.1} parent=19 // pred_check_branch
          %117 = sbr.rel (%p115) target = $region24
        $region23: #{spatial_attention_apply.1} parent=19 // pred_region
          %p118 = scmp.lt.s32.totalorder %s12, 1
          %s119 = scalar_select %p118, %s12, 1
          %s120 = smul.addr %s119, 15
          %s121 = smul.addr %s120, 8
          %s122 = scalar_lea.vmem %s0, %s121
        $region24: #{spatial_attention_apply.1} parent=19 // pred_fallthru
          _
      $region20: #{spatial_attention_apply.1} parent=5 // pred_fallthru
        _
      %p123 = scmp.le.s32.totalorder 1, %s12
      %p124 = scmp.lt.s32.totalorder %s12, 3
      %p125 = pnand %p123, %p124
      %p126 = pneg %p125
      // Predicated region
      $region25: #{spatial_attention_apply.1} parent=5 // pred_check
        _
      $region26: #{spatial_attention_apply.1} parent=5 // pred_check_branch
        %128 = sbr.rel (%p125) target = $region28
      $region27: #{spatial_attention_apply.1} parent=5 // pred_region
        %s129 = ssub.s32 %s12, 1
        // Predicated region
        $region29: #{spatial_attention_apply.1} parent=27 // pred_check
          %p130 = pneg %p59
        $region30: #{spatial_attention_apply.1} parent=27 // pred_check_branch
          %132 = sbr.rel (%p130) target = $region32
        $region31: #{spatial_attention_apply.1} parent=27 // pred_region
          %133 = dma.done [#allocation4], 32
        $region32: #{spatial_attention_apply.1} parent=27 // pred_fallthru
          _
        %134 = sfence
        %p135 = scmp.lt.s32.totalorder %s17, 1
        %s136 = scalar_select %p135, %s17, 1
        %s137 = smul.addr %s136, 15
        %s138 = smul.addr %s137, 8
        %s139 = scalar_lea.vmem %s0, %s138
        %p140 = pneg %p38
        %p141 = pneg %p35
        %p142 = pneg %p59
        %p143 = pneg %p56
        %p144 = pneg %p85
        %p145 = pneg %p82
        %s146 = sand.u32 %s72, 1
        %s147 = scalar_lea.sflag [#allocation3], %s146
        %s148 = sand.u32 %s72, 1
        %s149 = smul.addr %s148, 96
        %s150 = scalar_lea.vmem [#allocation5], %s149
        %p151 = scmp.lt.s32.totalorder %s17, 1
        %s152 = scalar_select %p151, %s17, 1
        %s153 = smul.addr %s152, 15
        %s154 = smul.addr %s153, 8
        %s155 = scalar_lea.vmem %s0, %s154
        %v156 = vld [vmem:[%s155] sm:$0xff]
        %v157 = vld [vmem:[%s155 + $0x8] sm:$0xff]
        %v158 = vld [vmem:[%s155 + $0x10] sm:$0xff]
        %v159 = vld [vmem:[%s155 + $0x18] sm:$0xff]
        %v160 = vld [vmem:[%s155 + $0x20] sm:$0x3]
        %v161 = vld [vmem:[%s155 + $0x28] sm:$0xff]
        %v162 = vld [vmem:[%s155 + $0x30] sm:$0xff]
        %v163 = vld [vmem:[%s155 + $0x38] sm:$0xff]
        %v164 = vld [vmem:[%s155 + $0x40] sm:$0xff]
        %v165 = vld [vmem:[%s155 + $0x48] sm:$0x3]
        %v166 = vld [vmem:[%s155 + $0x50] sm:$0xff]
        %v167 = vld [vmem:[%s155 + $0x58] sm:$0xff]
        %v168 = vld [vmem:[%s155 + $0x60] sm:$0xff]
        %v169 = vld [vmem:[%s155 + $0x68] sm:$0xff]
        %v170 = vld [vmem:[%s155 + $0x70] sm:$0x3]
        %vm171 = vcmask 277504
        %v172 = vsel %vm171, %v156, 0.0
        %v173 = vsel %vm171, %v161, 0.0
        %v174 = vadd.f32 %v172, %v173
        %v175 = vsel %vm171, %v166, 0.0
        %v176 = vadd.f32 %v174, %v175
        %v177 = vsel %vm171, %v157, 0.0
        %v178 = vsel %vm171, %v162, 0.0
        %v179 = vadd.f32 %v177, %v178
        %v180 = vsel %vm171, %v167, 0.0
        %v181 = vadd.f32 %v179, %v180
        %v182 = vsel %vm171, %v158, 0.0
        %v183 = vsel %vm171, %v163, 0.0
        %v184 = vadd.f32 %v182, %v183
        %v185 = vsel %vm171, %v168, 0.0
        %v186 = vadd.f32 %v184, %v185
        %v187 = vsel %vm171, %v159, 0.0
        %v188 = vsel %vm171, %v164, 0.0
        %v189 = vadd.f32 %v187, %v188
        %v190 = vsel %vm171, %v169, 0.0
        %v191 = vadd.f32 %v189, %v190
        %vm192 = vcmask 271360
        %v193 = vsel %vm192, %v160, 0.0
        %v194 = vsel %vm192, %v165, 0.0
        %v195 = vadd.f32 %v193, %v194
        %v196 = vsel %vm192, %v170, 0.0
        %v197 = vadd.f32 %v195, %v196
        %v198 = vrcp.pop 3.0
        %v199 = vmul.f32 %v176, %v198
        %v200 = vmul.f32 %v181, %v198
        %v201 = vmul.f32 %v186, %v198
        %v202 = vmul.f32 %v191, %v198
        %v203 = vmul.f32 %v197, %v198
        %v204 = vsel %vm171, %v156, -inf
        %v205 = vsel %vm171, %v161, -inf
        %v206 = vmax.f32 %v204, %v205
        %v207 = vsel %vm171, %v166, -inf
        %v208 = vmax.f32 %v206, %v207
        %v209 = vsel %vm171, %v157, -inf
        %v210 = vsel %vm171, %v162, -inf
        %v211 = vmax.f32 %v209, %v210
        %v212 = vsel %vm171, %v167, -inf
        %v213 = vmax.f32 %v211, %v212
        %v214 = vsel %vm171, %v158, -inf
        %v215 = vsel %vm171, %v163, -inf
        %v216 = vmax.f32 %v214, %v215
        %v217 = vsel %vm171, %v168, -inf
        %v218 = vmax.f32 %v216, %v217
        %v219 = vsel %vm171, %v159, -inf
        %v220 = vsel %vm171, %v164, -inf
        %v221 = vmax.f32 %v219, %v220
        %v222 = vsel %vm171, %v169, -inf
        %v223 = vmax.f32 %v221, %v222
        %v224 = vsel %vm192, %v160, -inf
        %v225 = vsel %vm192, %v165, -inf
        %v226 = vmax.f32 %v224, %v225
        %v227 = vsel %vm192, %v170, -inf
        %v228 = vmax.f32 %v226, %v227
        %s229 = sld [smem:[#allocation2]]
        %v230 = vstv %s229
        %v231 = vmul.f32 %v230, %v199
        %v232 = vmul.f32 %v230, %v200
        %v233 = vmul.f32 %v230, %v201
        %v234 = vmul.f32 %v230, %v202
        %v235 = vadd.f32 %v231, 0.0
        %v236 = vadd.f32 %v232, 0.0
        %v237 = vadd.f32 %v233, 0.0
        %v238 = vadd.f32 %v234, 0.0
        %s239 = sld [smem:[#allocation2 + $0x80]]
        %v240 = vstv %s239
        %v241 = vmul.f32 %v240, %v208
        %v242 = vmul.f32 %v240, %v213
        %v243 = vmul.f32 %v240, %v218
        %v244 = vmul.f32 %v240, %v223
        %v245 = vadd.f32 %v235, %v241
        %v246 = vadd.f32 %v236, %v242
        %v247 = vadd.f32 %v237, %v243
        %v248 = vadd.f32 %v238, %v244
        %s249 = sld [smem:[#allocation2 + $0x1]]
        %v250 = vstv %s249
        %v251 = vmul.f32 %v250, %v199
        %v252 = vmul.f32 %v250, %v200
        %v253 = vmul.f32 %v250, %v201
        %v254 = vmul.f32 %v250, %v202
        %259 = vrot.lane.b32.xlu0 %v251, 127
        %v260 = vpop.permute.xlu0 %259
        %261 = vrot.lane.b32.xlu0 %v252, 127
        %v262 = vpop.permute.xlu0 %261
        %263 = vrot.lane.b32.xlu0 %v253, 127
        %v264 = vpop.permute.xlu0 %263
        %265 = vrot.lane.b32.xlu0 %v254, 127
        %v266 = vpop.permute.xlu0 %265
        %v271 = vadd.f32 %v245, %v260
        %v272 = vadd.f32 %v246, %v262
        %v273 = vadd.f32 %v247, %v264
        %v274 = vadd.f32 %v248, %v266
        %s275 = sld [smem:[#allocation2 + $0x81]]
        %v276 = vstv %s275
        %v277 = vmul.f32 %v276, %v208
        %v278 = vmul.f32 %v276, %v213
        %v279 = vmul.f32 %v276, %v218
        %v280 = vmul.f32 %v276, %v223
        %285 = vrot.lane.b32.xlu0 %v277, 127
        %v286 = vpop.permute.xlu0 %285
        %287 = vrot.lane.b32.xlu0 %v278, 127
        %v288 = vpop.permute.xlu0 %287
        %289 = vrot.lane.b32.xlu0 %v279, 127
        %v290 = vpop.permute.xlu0 %289
        %291 = vrot.lane.b32.xlu0 %v280, 127
        %v292 = vpop.permute.xlu0 %291
        %v297 = vadd.f32 %v271, %v286
        %v298 = vadd.f32 %v272, %v288
        %v299 = vadd.f32 %v273, %v290
        %v300 = vadd.f32 %v274, %v292
        %s301 = sld [smem:[#allocation2 + $0x2]]
        %v302 = vstv %s301
        %v303 = vmul.f32 %v302, %v199
        %v304 = vmul.f32 %v302, %v200
        %v305 = vmul.f32 %v302, %v201
        %v306 = vmul.f32 %v302, %v202
        %311 = vrot.lane.b32.xlu0 %v303, 126
        %v312 = vpop.permute.xlu0 %311
        %313 = vrot.lane.b32.xlu0 %v304, 126
        %v314 = vpop.permute.xlu0 %313
        %315 = vrot.lane.b32.xlu0 %v305, 126
        %v316 = vpop.permute.xlu0 %315
        %317 = vrot.lane.b32.xlu0 %v306, 126
        %v318 = vpop.permute.xlu0 %317
        %v323 = vadd.f32 %v297, %v312
        %v324 = vadd.f32 %v298, %v314
        %v325 = vadd.f32 %v299, %v316
        %v326 = vadd.f32 %v300, %v318
        %s327 = sld [smem:[#allocation2 + $0x82]]
        %v328 = vstv %s327
        %v329 = vmul.f32 %v328, %v208
        %v330 = vmul.f32 %v328, %v213
        %v331 = vmul.f32 %v328, %v218
        %v332 = vmul.f32 %v328, %v223
        %337 = vrot.lane.b32.xlu0 %v329, 126
        %v338 = vpop.permute.xlu0 %337
        %339 = vrot.lane.b32.xlu0 %v330, 126
        %v340 = vpop.permute.xlu0 %339
        %341 = vrot.lane.b32.xlu0 %v331, 126
        %v342 = vpop.permute.xlu0 %341
        %343 = vrot.lane.b32.xlu0 %v332, 126
        %v344 = vpop.permute.xlu0 %343
        %v349 = vadd.f32 %v323, %v338
        %v350 = vadd.f32 %v324, %v340
        %v351 = vadd.f32 %v325, %v342
        %v352 = vadd.f32 %v326, %v344
        %s353 = sld [smem:[#allocation2 + $0x3]]
        %v354 = vstv %s353
        %v355 = vmul.f32 %v354, %v199
        %v356 = vmul.f32 %v354, %v200
        %v357 = vmul.f32 %v354, %v201
        %v358 = vmul.f32 %v354, %v202
        %v359 = vmul.f32 %v354, %v203
        %vm365 = vcmask 1046528
        %v366 = vrot.slane %v355, 1
        %v367 = vrot.slane %v356, 1
        %v368 = vsel %vm365, %v366, %v367
        %v369 = vrot.slane %v357, 1
        %v370 = vsel %vm365, %v367, %v369
        %v371 = vrot.slane %v358, 1
        %v372 = vsel %vm365, %v369, %v371
        %v373 = vrot.slane %v359, 1
        %v374 = vsel %vm365, %v371, %v373
        %v379 = vadd.f32 %v349, %v368
        %v380 = vadd.f32 %v350, %v370
        %v381 = vadd.f32 %v351, %v372
        %v382 = vadd.f32 %v352, %v374
        %s383 = sld [smem:[#allocation2 + $0x83]]
        %v384 = vstv %s383
        %v385 = vmul.f32 %v384, %v208
        %v386 = vmul.f32 %v384, %v213
        %v387 = vmul.f32 %v384, %v218
        %v388 = vmul.f32 %v384, %v223
        %v389 = vmul.f32 %v384, %v228
        %v395 = vrot.slane %v385, 1
        %v396 = vrot.slane %v386, 1
        %v397 = vsel %vm365, %v395, %v396
        %v398 = vrot.slane %v387, 1
        %v399 = vsel %vm365, %v396, %v398
        %v400 = vrot.slane %v388, 1
        %v401 = vsel %vm365, %v398, %v400
        %v402 = vrot.slane %v389, 1
        %v403 = vsel %vm365, %v400, %v402
        %v408 = vadd.f32 %v379, %v397
        %v409 = vadd.f32 %v380, %v399
        %v410 = vadd.f32 %v381, %v401
        %v411 = vadd.f32 %v382, %v403
        %s412 = sld [smem:[#allocation2 + $0x4]]
        %v413 = vstv %s412
        %v414 = vmul.f32 %v413, %v199
        %v415 = vmul.f32 %v413, %v200
        %v416 = vmul.f32 %v413, %v201
        %v417 = vmul.f32 %v413, %v202
        %v418 = vmul.f32 %v413, %v203
        %v424 = vrot.slane %v414, 1
        %v425 = vrot.slane %v415, 1
        %v426 = vsel %vm365, %v424, %v425
        %v427 = vrot.slane %v416, 1
        %v428 = vsel %vm365, %v425, %v427
        %v429 = vrot.slane %v417, 1
        %v430 = vsel %vm365, %v427, %v429
        %v431 = vrot.slane %v418, 1
        %v432 = vsel %vm365, %v429, %v431
        %433 = vrot.lane.b32.xlu0 %v426, 127
        %v434 = vpop.permute.xlu0 %433
        %435 = vrot.lane.b32.xlu0 %v428, 127
        %v436 = vpop.permute.xlu0 %435
        %437 = vrot.lane.b32.xlu0 %v430, 127
        %v438 = vpop.permute.xlu0 %437
        %439 = vrot.lane.b32.xlu0 %v432, 127
        %v440 = vpop.permute.xlu0 %439
        %v445 = vadd.f32 %v408, %v434
        %v446 = vadd.f32 %v409, %v436
        %v447 = vadd.f32 %v410, %v438
        %v448 = vadd.f32 %v411, %v440
        %s449 = sld [smem:[#allocation2 + $0x84]]
        %v450 = vstv %s449
        %v451 = vmul.f32 %v450, %v208
        %v452 = vmul.f32 %v450, %v213
        %v453 = vmul.f32 %v450, %v218
        %v454 = vmul.f32 %v450, %v223
        %v455 = vmul.f32 %v450, %v228
        %v461 = vrot.slane %v451, 1
        %v462 = vrot.slane %v452, 1
        %v463 = vsel %vm365, %v461, %v462
        %v464 = vrot.slane %v453, 1
        %v465 = vsel %vm365, %v462, %v464
        %v466 = vrot.slane %v454, 1
        %v467 = vsel %vm365, %v464, %v466
        %v468 = vrot.slane %v455, 1
        %v469 = vsel %vm365, %v466, %v468
        %470 = vrot.lane.b32.xlu0 %v463, 127
        %v471 = vpop.permute.xlu0 %470
        %472 = vrot.lane.b32.xlu0 %v465, 127
        %v473 = vpop.permute.xlu0 %472
        %474 = vrot.lane.b32.xlu0 %v467, 127
        %v475 = vpop.permute.xlu0 %474
        %476 = vrot.lane.b32.xlu0 %v469, 127
        %v477 = vpop.permute.xlu0 %476
        %v482 = vadd.f32 %v445, %v471
        %v483 = vadd.f32 %v446, %v473
        %v484 = vadd.f32 %v447, %v475
        %v485 = vadd.f32 %v448, %v477
        %s486 = sld [smem:[#allocation2 + $0x5]]
        %v487 = vstv %s486
        %v488 = vmul.f32 %v487, %v199
        %v489 = vmul.f32 %v487, %v200
        %v490 = vmul.f32 %v487, %v201
        %v491 = vmul.f32 %v487, %v202
        %v492 = vmul.f32 %v487, %v203
        %v498 = vrot.slane %v488, 1
        %v499 = vrot.slane %v489, 1
        %v500 = vsel %vm365, %v498, %v499
        %v501 = vrot.slane %v490, 1
        %v502 = vsel %vm365, %v499, %v501
        %v503 = vrot.slane %v491, 1
        %v504 = vsel %vm365, %v501, %v503
        %v505 = vrot.slane %v492, 1
        %v506 = vsel %vm365, %v503, %v505
        %507 = vrot.lane.b32.xlu0 %v500, 126
        %v508 = vpop.permute.xlu0 %507
        %509 = vrot.lane.b32.xlu0 %v502, 126
        %v510 = vpop.permute.xlu0 %509
        %511 = vrot.lane.b32.xlu0 %v504, 126
        %v512 = vpop.permute.xlu0 %511
        %513 = vrot.lane.b32.xlu0 %v506, 126
        %v514 = vpop.permute.xlu0 %513
        %v519 = vadd.f32 %v482, %v508
        %v520 = vadd.f32 %v483, %v510
        %v521 = vadd.f32 %v484, %v512
        %v522 = vadd.f32 %v485, %v514
        %s523 = sld [smem:[#allocation2 + $0x85]]
        %v524 = vstv %s523
        %v525 = vmul.f32 %v524, %v208
        %v526 = vmul.f32 %v524, %v213
        %v527 = vmul.f32 %v524, %v218
        %v528 = vmul.f32 %v524, %v223
        %v529 = vmul.f32 %v524, %v228
        %v535 = vrot.slane %v525, 1
        %v536 = vrot.slane %v526, 1
        %v537 = vsel %vm365, %v535, %v536
        %v538 = vrot.slane %v527, 1
        %v539 = vsel %vm365, %v536, %v538
        %v540 = vrot.slane %v528, 1
        %v541 = vsel %vm365, %v538, %v540
        %v542 = vrot.slane %v529, 1
        %v543 = vsel %vm365, %v540, %v542
        %544 = vrot.lane.b32.xlu0 %v537, 126
        %v545 = vpop.permute.xlu0 %544
        %546 = vrot.lane.b32.xlu0 %v539, 126
        %v547 = vpop.permute.xlu0 %546
        %548 = vrot.lane.b32.xlu0 %v541, 126
        %v549 = vpop.permute.xlu0 %548
        %550 = vrot.lane.b32.xlu0 %v543, 126
        %v551 = vpop.permute.xlu0 %550
        %v556 = vadd.f32 %v519, %v545
        %v557 = vadd.f32 %v520, %v547
        %v558 = vadd.f32 %v521, %v549
        %v559 = vadd.f32 %v522, %v551
        %s560 = sld [smem:[#allocation2 + $0x6]]
        %v561 = vstv %s560
        %v562 = vmul.f32 %v561, %v199
        %v563 = vmul.f32 %v561, %v200
        %v564 = vmul.f32 %v561, %v201
        %v565 = vmul.f32 %v561, %v202
        %v566 = vmul.f32 %v561, %v203
        %vm572 = vcmask 1045504
        %v573 = vrot.slane %v562, 2
        %v574 = vrot.slane %v563, 2
        %v575 = vsel %vm572, %v573, %v574
        %v576 = vrot.slane %v564, 2
        %v577 = vsel %vm572, %v574, %v576
        %v578 = vrot.slane %v565, 2
        %v579 = vsel %vm572, %v576, %v578
        %v580 = vrot.slane %v566, 2
        %v581 = vsel %vm572, %v578, %v580
        %v586 = vadd.f32 %v556, %v575
        %v587 = vadd.f32 %v557, %v577
        %v588 = vadd.f32 %v558, %v579
        %v589 = vadd.f32 %v559, %v581
        %s590 = sld [smem:[#allocation2 + $0x86]]
        %v591 = vstv %s590
        %v592 = vmul.f32 %v591, %v208
        %v593 = vmul.f32 %v591, %v213
        %v594 = vmul.f32 %v591, %v218
        %v595 = vmul.f32 %v591, %v223
        %v596 = vmul.f32 %v591, %v228
        %v602 = vrot.slane %v592, 2
        %v603 = vrot.slane %v593, 2
        %v604 = vsel %vm572, %v602, %v603
        %v605 = vrot.slane %v594, 2
        %v606 = vsel %vm572, %v603, %v605
        %v607 = vrot.slane %v595, 2
        %v608 = vsel %vm572, %v605, %v607
        %v609 = vrot.slane %v596, 2
        %v610 = vsel %vm572, %v607, %v609
        %v615 = vadd.f32 %v586, %v604
        %v616 = vadd.f32 %v587, %v606
        %v617 = vadd.f32 %v588, %v608
        %v618 = vadd.f32 %v589, %v610
        %s619 = sld [smem:[#allocation2 + $0x7]]
        %v620 = vstv %s619
        %v621 = vmul.f32 %v620, %v199
        %v622 = vmul.f32 %v620, %v200
        %v623 = vmul.f32 %v620, %v201
        %v624 = vmul.f32 %v620, %v202
        %v625 = vmul.f32 %v620, %v203
        %v631 = vrot.slane %v621, 2
        %v632 = vrot.slane %v622, 2
        %v633 = vsel %vm572, %v631, %v632
        %v634 = vrot.slane %v623, 2
        %v635 = vsel %vm572, %v632, %v634
        %v636 = vrot.slane %v624, 2
        %v637 = vsel %vm572, %v634, %v636
        %v638 = vrot.slane %v625, 2
        %v639 = vsel %vm572, %v636, %v638
        %640 = vrot.lane.b32.xlu0 %v633, 127
        %v641 = vpop.permute.xlu0 %640
        %642 = vrot.lane.b32.xlu0 %v635, 127
        %v643 = vpop.permute.xlu0 %642
        %644 = vrot.lane.b32.xlu0 %v637, 127
        %v645 = vpop.permute.xlu0 %644
        %646 = vrot.lane.b32.xlu0 %v639, 127
        %v647 = vpop.permute.xlu0 %646
        %v652 = vadd.f32 %v615, %v641
        %v653 = vadd.f32 %v616, %v643
        %v654 = vadd.f32 %v617, %v645
        %v655 = vadd.f32 %v618, %v647
        %s656 = sld [smem:[#allocation2 + $0x87]]
        %v657 = vstv %s656
        %v658 = vmul.f32 %v657, %v208
        %v659 = vmul.f32 %v657, %v213
        %v660 = vmul.f32 %v657, %v218
        %v661 = vmul.f32 %v657, %v223
        %v662 = vmul.f32 %v657, %v228
        %v668 = vrot.slane %v658, 2
        %v669 = vrot.slane %v659, 2
        %v670 = vsel %vm572, %v668, %v669
        %v671 = vrot.slane %v660, 2
        %v672 = vsel %vm572, %v669, %v671
        %v673 = vrot.slane %v661, 2
        %v674 = vsel %vm572, %v671, %v673
        %v675 = vrot.slane %v662, 2
        %v676 = vsel %vm572, %v673, %v675
        %677 = vrot.lane.b32.xlu0 %v670, 127
        %v678 = vpop.permute.xlu0 %677
        %679 = vrot.lane.b32.xlu0 %v672, 127
        %v680 = vpop.permute.xlu0 %679
        %681 = vrot.lane.b32.xlu0 %v674, 127
        %v682 = vpop.permute.xlu0 %681
        %683 = vrot.lane.b32.xlu0 %v676, 127
        %v684 = vpop.permute.xlu0 %683
        %v689 = vadd.f32 %v652, %v678
        %v690 = vadd.f32 %v653, %v680
        %v691 = vadd.f32 %v654, %v682
        %v692 = vadd.f32 %v655, %v684
        %s693 = sld [smem:[#allocation2 + $0x8]]
        %v694 = vstv %s693
        %v695 = vmul.f32 %v694, %v199
        %v696 = vmul.f32 %v694, %v200
        %v697 = vmul.f32 %v694, %v201
        %v698 = vmul.f32 %v694, %v202
        %v699 = vmul.f32 %v694, %v203
        %v705 = vrot.slane %v695, 2
        %v706 = vrot.slane %v696, 2
        %v707 = vsel %vm572, %v705, %v706
        %v708 = vrot.slane %v697, 2
        %v709 = vsel %vm572, %v706, %v708
        %v710 = vrot.slane %v698, 2
        %v711 = vsel %vm572, %v708, %v710
        %v712 = vrot.slane %v699, 2
        %v713 = vsel %vm572, %v710, %v712
        %714 = vrot.lane.b32.xlu0 %v707, 126
        %v715 = vpop.permute.xlu0 %714
        %716 = vrot.lane.b32.xlu0 %v709, 126
        %v717 = vpop.permute.xlu0 %716
        %718 = vrot.lane.b32.xlu0 %v711, 126
        %v719 = vpop.permute.xlu0 %718
        %720 = vrot.lane.b32.xlu0 %v713, 126
        %v721 = vpop.permute.xlu0 %720
        %v726 = vadd.f32 %v689, %v715
        %v727 = vadd.f32 %v690, %v717
        %v728 = vadd.f32 %v691, %v719
        %v729 = vadd.f32 %v692, %v721
        %s730 = sld [smem:[#allocation2 + $0x88]]
        %v731 = vstv %s730
        %v732 = vmul.f32 %v731, %v208
        %v733 = vmul.f32 %v731, %v213
        %v734 = vmul.f32 %v731, %v218
        %v735 = vmul.f32 %v731, %v223
        %v736 = vmul.f32 %v731, %v228
        %v742 = vrot.slane %v732, 2
        %v743 = vrot.slane %v733, 2
        %v744 = vsel %vm572, %v742, %v743
        %v745 = vrot.slane %v734, 2
        %v746 = vsel %vm572, %v743, %v745
        %v747 = vrot.slane %v735, 2
        %v748 = vsel %vm572, %v745, %v747
        %v749 = vrot.slane %v736, 2
        %v750 = vsel %vm572, %v747, %v749
        %751 = vrot.lane.b32.xlu0 %v744, 126
        %v752 = vpop.permute.xlu0 %751
        %753 = vrot.lane.b32.xlu0 %v746, 126
        %v754 = vpop.permute.xlu0 %753
        %755 = vrot.lane.b32.xlu0 %v748, 126
        %v756 = vpop.permute.xlu0 %755
        %757 = vrot.lane.b32.xlu0 %v750, 126
        %v758 = vpop.permute.xlu0 %757
        %v763 = vadd.f32 %v726, %v752
        %v764 = vadd.f32 %v727, %v754
        %v765 = vadd.f32 %v728, %v756
        %v766 = vadd.f32 %v729, %v758
        %v767 = vxor.u32 %v763, 2147483648
        %v768 = vxor.u32 %v764, 2147483648
        %v769 = vxor.u32 %v765, 2147483648
        %v770 = vxor.u32 %v766, 2147483648
        %v771 = vmul.f32 %v767, 1.442695
        %v772 = vpow.pop %v771
        %v773 = vmul.f32 %v768, 1.442695
        %v774 = vpow.pop %v773
        %v775 = vmul.f32 %v769, 1.442695
        %v776 = vpow.pop %v775
        %v777 = vmul.f32 %v770, 1.442695
        %v778 = vpow.pop %v777
        %v779 = vadd.f32 %v772, 1.0
        %v780 = vadd.f32 %v774, 1.0
        %v781 = vadd.f32 %v776, 1.0
        %v782 = vadd.f32 %v778, 1.0
        %v783 = vrcp.pop %v779
        %v784 = vmul.f32 1.0, %v783
        %v785 = vrcp.pop %v780
        %v786 = vmul.f32 1.0, %v785
        %v787 = vrcp.pop %v781
        %v788 = vmul.f32 1.0, %v787
        %v789 = vrcp.pop %v782
        %v790 = vmul.f32 1.0, %v789
        %vm795 = vcmask 1040384
        %v796 = vrot.slane %v784, 7
        %v797 = vrot.slane %v786, 7
        %v798 = vsel %vm795, %v796, %v797
        %v799 = vrot.slane %v788, 7
        %v800 = vsel %vm795, %v797, %v799
        %v801 = vrot.slane %v790, 7
        %v802 = vsel %vm795, %v799, %v801
        %803 = vrot.lane.b32.xlu0 %v796, 1
        %v804 = vpop.permute.xlu0 %803
        %805 = vrot.lane.b32.xlu0 %v798, 1
        %v806 = vpop.permute.xlu0 %805
        %807 = vrot.lane.b32.xlu0 %v800, 1
        %v808 = vpop.permute.xlu0 %807
        %809 = vrot.lane.b32.xlu0 %v802, 1
        %v810 = vpop.permute.xlu0 %809
        %811 = vrot.lane.b32.xlu0 %v801, 1
        %v812 = vpop.permute.xlu0 %811
        %v818 = vmul.f32 %v156, %v804
        %v819 = vmul.f32 %v157, %v806
        %v820 = vmul.f32 %v158, %v808
        %v821 = vmul.f32 %v159, %v810
        %v822 = vmul.f32 %v160, %v812
        %v823 = vmul.f32 %v161, %v804
        %v824 = vmul.f32 %v162, %v806
        %v825 = vmul.f32 %v163, %v808
        %v826 = vmul.f32 %v164, %v810
        %v827 = vmul.f32 %v165, %v812
        %v828 = vmul.f32 %v166, %v804
        %v829 = vmul.f32 %v167, %v806
        %v830 = vmul.f32 %v168, %v808
        %v831 = vmul.f32 %v169, %v810
        %v832 = vmul.f32 %v170, %v812
        %848 = vrot.lane.b32.xlu0 %v818, 127
        %v849 = vpop.permute.xlu0 %848
        %850 = vrot.lane.b32.xlu0 %v819, 127
        %v851 = vpop.permute.xlu0 %850
        %852 = vrot.lane.b32.xlu0 %v820, 127
        %v853 = vpop.permute.xlu0 %852
        %854 = vrot.lane.b32.xlu0 %v821, 127
        %v855 = vpop.permute.xlu0 %854
        %856 = vrot.lane.b32.xlu0 %v822, 127
        %v857 = vpop.permute.xlu0 %856
        %858 = vrot.lane.b32.xlu0 %v823, 127
        %v859 = vpop.permute.xlu0 %858
        %860 = vrot.lane.b32.xlu0 %v824, 127
        %v861 = vpop.permute.xlu0 %860
        %862 = vrot.lane.b32.xlu0 %v825, 127
        %v863 = vpop.permute.xlu0 %862
        %864 = vrot.lane.b32.xlu0 %v826, 127
        %v865 = vpop.permute.xlu0 %864
        %866 = vrot.lane.b32.xlu0 %v827, 127
        %v867 = vpop.permute.xlu0 %866
        %868 = vrot.lane.b32.xlu0 %v828, 127
        %v869 = vpop.permute.xlu0 %868
        %870 = vrot.lane.b32.xlu0 %v829, 127
        %v871 = vpop.permute.xlu0 %870
        %872 = vrot.lane.b32.xlu0 %v830, 127
        %v873 = vpop.permute.xlu0 %872
        %874 = vrot.lane.b32.xlu0 %v831, 127
        %v875 = vpop.permute.xlu0 %874
        %876 = vrot.lane.b32.xlu0 %v832, 127
        %v877 = vpop.permute.xlu0 %876
        %vm893 = vcmask 261121
        %894 = vst.msk [vmem:[%s150 - $0x1] sm:$0xfe] %vm893, %v849
        %vm895 = vcmask 261120
        %896 = vst.msk [vmem:[%s150 + $0x7] sm:$0xff] %vm895, %v851
        %897 = vst.msk [vmem:[%s150 + $0xf] sm:$0xff] %vm895, %v853
        %898 = vst.msk [vmem:[%s150 + $0x17] sm:$0xff] %vm895, %v855
        %vm899 = vcmask 253952
        %900 = vst.msk [vmem:[%s150 + $0x1f] sm:$0x1] %vm899, %v857
        %901 = vst.msk [vmem:[%s150 + $0x1f] sm:$0xfe] %vm893, %v859
        %902 = vst.msk [vmem:[%s150 + $0x27] sm:$0xff] %vm895, %v861
        %903 = vst.msk [vmem:[%s150 + $0x2f] sm:$0xff] %vm895, %v863
        %904 = vst.msk [vmem:[%s150 + $0x37] sm:$0xff] %vm895, %v865
        %905 = vst.msk [vmem:[%s150 + $0x3f] sm:$0x1] %vm899, %v867
        %906 = vst.msk [vmem:[%s150 + $0x3f] sm:$0xfe] %vm893, %v869
        %907 = vst.msk [vmem:[%s150 + $0x47] sm:$0xff] %vm895, %v871
        %908 = vst.msk [vmem:[%s150 + $0x4f] sm:$0xff] %vm895, %v873
        %909 = vst.msk [vmem:[%s150 + $0x57] sm:$0xff] %vm895, %v875
        %910 = vst.msk [vmem:[%s150 + $0x5f] sm:$0x1] %vm899, %v877
        %s911 = sand.u32 %s72, 1
        %s912 = scalar_lea.sflag [#allocation3], %s911
        %s913 = sand.u32 %s72, 1
        %s914 = smul.addr %s913, 96
        %s915 = scalar_lea.vmem [#allocation5], %s914
        // Predicated region
        $region33: #{spatial_attention_apply.1} parent=27 // pred_check
          %p916 = pneg %p82
        $region34: #{spatial_attention_apply.1} parent=27 // pred_check_branch
          %918 = sbr.rel (%p916) target = $region36
        $region35: #{spatial_attention_apply.1} parent=27 // pred_region
          %s920 = ssub.s32 1536, 1536
          %921 = vsyncadd %s912, %s920
          %s922 = smul.addr %s17, 12
          %s923 = smul.addr %s922, 128
          %s924 = scalar_lea.hbm %s2, %s923
          %s925 = sshll.u32 %s915, 4
          %s926 = int_to_ptr.vmem [resolvable:$true] %s925
          %931 = dma.vmem_to_hbm [thread:$0]  %s926, 1536, %s924, %s912, 128, 128, 8
        $region36: #{spatial_attention_apply.1} parent=27 // pred_fallthru
          _
      $region28: #{spatial_attention_apply.1} parent=5 // pred_fallthru
        _
      %p932 = scmp.le.s32.totalorder 2, %s12
      // Predicated region
      $region37: #{spatial_attention_apply.1} parent=5 // pred_check
        %p933 = pneg %p932
      $region38: #{spatial_attention_apply.1} parent=5 // pred_check_branch
        %935 = sbr.rel (%p933) target = $region40
      $region39: #{spatial_attention_apply.1} parent=5 // pred_region
        %s936 = ssub.s32 %s12, 2
        // Predicated region
        $region41: #{spatial_attention_apply.1} parent=39 // pred_check
          %p937 = pneg %p88
        $region42: #{spatial_attention_apply.1} parent=39 // pred_check_branch
          %939 = sbr.rel (%p937) target = $region44
        $region43: #{spatial_attention_apply.1} parent=39 // pred_region
          %s940 = sand.u32 %s73, 1
          %s941 = scalar_lea.sflag [#allocation3], %s940
          %s942 = sand.u32 %s73, 1
          %s943 = smul.addr %s942, 96
          %s944 = scalar_lea.vmem [#allocation5], %s943
          %945 = dma.done %s941, 1536
        $region44: #{spatial_attention_apply.1} parent=39 // pred_fallthru
          _
      $region40: #{spatial_attention_apply.1} parent=5 // pred_fallthru
        _
    $region6: #{spatial_attention_apply.1} parent=1 // loop_footer
      %s16 = sadd.s32 1, %s12
    $region7: #{spatial_attention_apply.1} parent=1 // loop_footer_branch
      %11 = sbr.rel target = $region3
    $region8: #{spatial_attention_apply.1} parent=1 // loop_exit
      _
    %946 = vsyncpa [#allocation3], 1
    %s947 = scalar_lea.sflag [#allocation3], 1
    %948 = vsyncpa %s947, 1
    %949 = vsyncpa [#allocation4], 1
    %s950 = scalar_lea.sflag [#allocation4], 1
    %951 = vsyncpa %s950, 1

</llo_original>
